<compile_context>
chip_gen: v6e
topology: v6e:2x2x1
jax: 0.10.0
libtpu: 0.0.40
codegen_flags: <defaults>
</compile_context>

<pallas_src>
import jax
import jax.numpy as jnp
from jax.experimental import pallas as pl
from jax.experimental.pallas import tpu as pltpu


def _round_up(x, m):
    return (x + m - 1) // m * m


def gcn_kernel(a_ref, xw_ref, b1_ref, out_ref):
    # a_ref, xw_ref arrive pre-cast to bf16 (native MXU input format).
    a = a_ref[...]                                              # [NP, NP] bf16

    # Layer 1: h = relu(A_hat @ (X W1) + b1)  (f32 accumulation / VPU work)
    h = jnp.dot(a, xw_ref[...],
                preferred_element_type=jnp.float32) + b1_ref[...]
    h = jnp.maximum(h, 0.0)                                     # [NP, HP] f32

    # Layer 2 aggregation half: out = A_hat @ h  (h @ W2 hoisted to wrapper).
    out_ref[...] = jnp.dot(a, h.astype(jnp.bfloat16),
                           preferred_element_type=jnp.float32)  # [NP, HP] f32


def gcn_forward(a_hat, x, w1, b1, w2, b2):
    n, _ = x.shape
    h_dim = w1.shape[1]

    # Pad to 128 multiples: full MXU tiles, unmasked (lane-dense) loads/stores.
    NP = _round_up(n, 128)
    HP = _round_up(h_dim, 128)

    # Padded rows/cols of A_hat are zero, so padded nodes contribute nothing to
    # real rows; padded hidden columns are zero by construction.
    a_pad = jnp.zeros((NP, NP), jnp.bfloat16).at[:n, :n].set(
        a_hat.astype(jnp.bfloat16))

    # Hoist the degenerate [n,5]@[5,h] matmul into XLA (fuses upstream).
    xw = (x @ w1).astype(jnp.bfloat16)                          # [n, h]
    xw_pad = jnp.zeros((NP, HP), jnp.bfloat16).at[:n, :h_dim].set(xw)
    b1_pad = jnp.zeros((1, HP), jnp.float32).at[:, :h_dim].set(b1)

    cost = pl.CostEstimate(
        flops=2 * (NP * NP * HP) * 2,            # two NPxNPxHP matmuls
        transcendentals=0,
        bytes_accessed=2 * NP * NP + 2 * NP * HP + 4 * HP + 4 * NP * HP,
    )

    vmem = pl.BlockSpec(memory_space=pltpu.MemorySpace.VMEM)
    ah_pad = pl.pallas_call(
        gcn_kernel,
        out_shape=jax.ShapeDtypeStruct((NP, HP), jnp.float32),
        in_specs=[vmem, vmem, vmem],
        out_specs=vmem,
        cost_estimate=cost,
    )(a_pad, xw_pad, b1_pad)

    # Associativity: A @ (h W2) + b2 == (A @ h) @ W2 + b2. The small matmul,
    # slice, and bias add fuse in XLA on the real (unpadded) block.
    return ah_pad[:n, :h_dim] @ w2 + b2


def build_normalized_adjacency(n):
    # Deterministic graph: ring (i <-> i+1 mod n) plus self-loops,
    # symmetric normalization A_hat = D^{-1/2} A D^{-1/2}.
    idx = jnp.arange(n)
    a = jnp.zeros((n, n), jnp.float32)
    a = a.at[idx, (idx + 1) % n].set(1.0)
    a = a.at[(idx + 1) % n, idx].set(1.0)
    a = a.at[idx, idx].set(1.0)
    deg = a.sum(axis=1)
    d_inv_sqrt = 1.0 / jnp.sqrt(deg)
    return d_inv_sqrt[:, None] * a * d_inv_sqrt[None, :]


if __name__ == "__main__":
    # Shapes implied by the module: nn.Embedding(82, 5) -> N=82 nodes, in_feats=5.
    N, in_feats, hidden_size, num_classes = 82, 5, 32, 8

    key = jax.random.PRNGKey(0)
    k_emb, k_w1, k_b1, k_w2, k_b2 = jax.random.split(key, 5)

    # "Embedding weight" used as node features (inputs = embed.weight).
    inputs = jax.random.normal(k_emb, (N, in_feats), jnp.float32)

    # Deterministic GraphConv parameters (Glorot-like scaling) + small biases
    # so both bias paths are actually exercised.
    w1 = jax.random.normal(k_w1, (in_feats, hidden_size), jnp.float32) * (
        1.0 / jnp.sqrt(in_feats))
    b1 = 0.1 * jax.random.normal(k_b1, (1, hidden_size), jnp.float32)
    w2 = jax.random.normal(k_w2, (hidden_size, num_classes), jnp.float32) * (
        1.0 / jnp.sqrt(hidden_size))
    b2 = 0.1 * jax.random.normal(k_b2, (1, num_classes), jnp.float32)

    a_hat = build_normalized_adjacency(N)

    out = gcn_forward(a_hat, inputs, w1, b1, w2, b2)
    out = jax.block_until_ready(out)

    # Pure-JAX f32 reference (kernel uses bf16 MXU inputs -> loose tolerance).
    h_ref = jnp.maximum(a_hat @ inputs @ w1 + b1, 0.0)
    out_ref = a_hat @ h_ref @ w2 + b2
    assert out.shape == (N, num_classes)
    assert jnp.allclose(out, out_ref, atol=2e-2, rtol=2e-2), float(
        jnp.max(jnp.abs(out - out_ref)))

    print("KERNEL_OK")
</pallas_src>

<mosaic_0001>
module attributes {stable_mosaic.version = 11 : i64} {
  func.func @gcn_kernel(%arg0: memref<128x128xbf16, #tpu.memory_space<vmem>>, %arg1: memref<128x128xbf16, #tpu.memory_space<vmem>>, %arg2: memref<1x128xf32, #tpu.memory_space<vmem>>, %arg3: memref<128x128xf32, #tpu.memory_space<vmem>>) attributes {dimension_semantics = [], scalar_prefetch = 0 : i64, scratch_operands = 0 : i64, tpu.core_type = #tpu.core_type<tc>} {
    %c0 = arith.constant 0 : index
    %c0_0 = arith.constant 0 : index
    %0 = vector.load %arg0[%c0, %c0_0] : memref<128x128xbf16, #tpu.memory_space<vmem>>, vector<128x128xbf16>
    %c0_1 = arith.constant 0 : index
    %c0_2 = arith.constant 0 : index
    %1 = vector.load %arg1[%c0_1, %c0_2] : memref<128x128xbf16, #tpu.memory_space<vmem>>, vector<128x128xbf16>
    %cst = arith.constant dense<0.000000e+00> : vector<128x128xf32>
    %2 = tpu.matmul %0, %1, %cst {dimension_numbers = #tpu.dot_dimension_numbers<[1], [0], [0], [1], [0, 0, 1, 1], [], []>} : vector<128x128xbf16>, vector<128x128xbf16>, vector<128x128xf32> -> vector<128x128xf32>
    %c0_3 = arith.constant 0 : index
    %c0_4 = arith.constant 0 : index
    %3 = vector.load %arg2[%c0_3, %c0_4] : memref<1x128xf32, #tpu.memory_space<vmem>>, vector<1x128xf32>
    %4 = vector.broadcast %3 : vector<1x128xf32> to vector<128x128xf32>
    %5 = arith.addf %2, %4 : vector<128x128xf32>
    %cst_5 = arith.constant 0.000000e+00 : f32
    %6 = vector.broadcast %cst_5 : f32 to vector<128x128xf32>
    %7 = arith.maximumf %5, %6 : vector<128x128xf32>
    %8 = arith.truncf %7 : vector<128x128xf32> to vector<128x128xbf16>
    %cst_6 = arith.constant dense<0.000000e+00> : vector<128x128xf32>
    %9 = tpu.matmul %0, %8, %cst_6 {dimension_numbers = #tpu.dot_dimension_numbers<[1], [0], [0], [1], [0, 0, 1, 1], [], []>} : vector<128x128xbf16>, vector<128x128xbf16>, vector<128x128xf32> -> vector<128x128xf32>
    %c0_7 = arith.constant 0 : index
    %c0_8 = arith.constant 0 : index
    %10 = vector.load %arg3[%c0_7, %c0_8] : memref<128x128xf32, #tpu.memory_space<vmem>>, vector<128x128xf32>
    tpu.vector_store %arg3[%c0_7, %c0_8], %9 {strides = array<i32>} : memref<128x128xf32, #tpu.memory_space<vmem>>, vector<128x128xf32>,
    return
  }
}

</mosaic_0001>

<llo_original>
// kernel: tpu_custom_call.1
$region0: #{tpu_custom_call.1}
  #allocation0 [shape = 'u32[]', space=smem, size = 0x4, offset = 0x4, fixed_abs, tag = 'smem constant byte address 0x4 - core index']
  #allocation1 [shape = 'u32[144,128]{1,0:T(1,128)}', space=vmem, size = 0x12000, scoped, tag = 'internal scratch']
  %s0 = inlined_call_operand.hbm [shape: bf16[128,128], index: 0, kind: input, shape index: {}]
  %s1 = inlined_call_operand.hbm [shape: bf16[128,128], index: 1, kind: input, shape index: {}]
  %s2 = inlined_call_operand.vmem [shape: f32[1,128], index: 2, kind: input, shape index: {}]
  %s3 = inlined_call_operand.hbm [shape: f32[128,128], index: 3, kind: output, shape index: {}]
  %s4 = sld [smem:[#allocation0]]
  $region30: #{tpu_custom_call.1} parent=0
    _
  %s6 = ssub.s32 1, %s4
  %s7 = scalar_select 0, %s6, %s4
  $region1: #{tpu_custom_call.1} parent=0
    #allocation2 [shape = 'u8[32768]{0}', space=vmem, size = 0x8000, scoped, tag = 'input window, operand 0, single buffered']
    #allocation3 [shape = 's32[1]{0}', space=sflag, size = 0x4, scoped, tag = 'scoped memory for tpu_custom_call.1']
    #allocation4 [shape = 's32[1]{0}', space=sflag, size = 0x4, scoped, tag = 'scoped memory for tpu_custom_call.1']
    #allocation5 [shape = 'u8[32768]{0}', space=vmem, size = 0x8000, scoped, tag = 'input window, operand 1, single buffered']
    #allocation6 [shape = 's32[1]{0}', space=sflag, size = 0x4, scoped, tag = 'scoped memory for tpu_custom_call.1']
    #allocation7 [shape = 'u8[65536]{0}', space=vmem, size = 0x10000, scoped, tag = 'output window, operand 0, single buffered']
    %8 = vsyncpa [#allocation3], 0
    %9 = vsyncpa [#allocation6], 0
    %10 = vsyncpa [#allocation4], 0
    // Predicated region
    $region2: #{tpu_custom_call.1} parent=1 // pred_check
      _
    $region3: #{tpu_custom_call.1} parent=1 // pred_check_branch
      %12 = sbr.rel (0) target = $region5
    $region4: #{tpu_custom_call.1} parent=1 // pred_region
      %s14 = ssub.s32 1024, 1024
      %15 = vsyncadd [#allocation3], %s14
      %s16 = sshll.u32 [#allocation2], 4
      %s17 = int_to_ptr.vmem [resolvable:$true] %s16
      %22 = dma.hbm_to_vmem [thread:$0]  %s0, 1024, %s17, [#allocation3], 64, 64, 4
    $region5: #{tpu_custom_call.1} parent=1 // pred_fallthru
      _
    // Predicated region
    $region6: #{tpu_custom_call.1} parent=1 // pred_check
      _
    $region7: #{tpu_custom_call.1} parent=1 // pred_check_branch
      %24 = sbr.rel (0) target = $region9
    $region8: #{tpu_custom_call.1} parent=1 // pred_region
      %s26 = ssub.s32 1024, 1024
      %27 = vsyncadd [#allocation6], %s26
      %s28 = sshll.u32 [#allocation5], 4
      %s29 = int_to_ptr.vmem [resolvable:$true] %s28
      %34 = dma.hbm_to_vmem [thread:$0]  %s1, 1024, %s29, [#allocation6], 64, 64, 4
    $region9: #{tpu_custom_call.1} parent=1 // pred_fallthru
      _
    // Predicated region
    $region10: #{tpu_custom_call.1} parent=1 // pred_check
      _
    $region11: #{tpu_custom_call.1} parent=1 // pred_check_branch
      %36 = sbr.rel (0) target = $region13
    $region12: #{tpu_custom_call.1} parent=1 // pred_region
      _
    $region13: #{tpu_custom_call.1} parent=1 // pred_fallthru
      _
    // Predicated region
    $region14: #{tpu_custom_call.1} parent=1 // pred_check
      _
    $region15: #{tpu_custom_call.1} parent=1 // pred_check_branch
      %38 = sbr.rel (0) target = $region17
    $region16: #{tpu_custom_call.1} parent=1 // pred_region
      %39 = dma.done [#allocation3], 1024
    $region17: #{tpu_custom_call.1} parent=1 // pred_fallthru
      _
    // Predicated region
    $region18: #{tpu_custom_call.1} parent=1 // pred_check
      _
    $region19: #{tpu_custom_call.1} parent=1 // pred_check_branch
      %41 = sbr.rel (0) target = $region21
    $region20: #{tpu_custom_call.1} parent=1 // pred_region
      %42 = dma.done [#allocation6], 1024
    $region21: #{tpu_custom_call.1} parent=1 // pred_fallthru
      _
    %v44 = vld [vmem:[#allocation2] sm:$0xf]
    %v45 = vld [vmem:[#allocation2 + $0x4] sm:$0xf]
    %v46 = vld [vmem:[#allocation2 + $0x8] sm:$0xf]
    %v47 = vld [vmem:[#allocation2 + $0xc] sm:$0xf]
    %v48 = vld [vmem:[#allocation2 + $0x10] sm:$0xf]
    %v49 = vld [vmem:[#allocation2 + $0x14] sm:$0xf]
    %v50 = vld [vmem:[#allocation2 + $0x18] sm:$0xf]
    %v51 = vld [vmem:[#allocation2 + $0x1c] sm:$0xf]
    %v52 = vld [vmem:[#allocation2 + $0x20] sm:$0xf]
    %v53 = vld [vmem:[#allocation2 + $0x24] sm:$0xf]
    %v54 = vld [vmem:[#allocation2 + $0x28] sm:$0xf]
    %v55 = vld [vmem:[#allocation2 + $0x2c] sm:$0xf]
    %v56 = vld [vmem:[#allocation2 + $0x30] sm:$0xf]
    %v57 = vld [vmem:[#allocation2 + $0x34] sm:$0xf]
    %v58 = vld [vmem:[#allocation2 + $0x38] sm:$0xf]
    %v59 = vld [vmem:[#allocation2 + $0x3c] sm:$0xf]
    %v60 = vld [vmem:[#allocation5] sm:$0xf]
    %v61 = vld [vmem:[#allocation5 + $0x4] sm:$0xf]
    %v62 = vld [vmem:[#allocation5 + $0x8] sm:$0xf]
    %v63 = vld [vmem:[#allocation5 + $0xc] sm:$0xf]
    %v64 = vld [vmem:[#allocation5 + $0x10] sm:$0xf]
    %v65 = vld [vmem:[#allocation5 + $0x14] sm:$0xf]
    %v66 = vld [vmem:[#allocation5 + $0x18] sm:$0xf]
    %v67 = vld [vmem:[#allocation5 + $0x1c] sm:$0xf]
    %v68 = vld [vmem:[#allocation5 + $0x20] sm:$0xf]
    %v69 = vld [vmem:[#allocation5 + $0x24] sm:$0xf]
    %v70 = vld [vmem:[#allocation5 + $0x28] sm:$0xf]
    %v71 = vld [vmem:[#allocation5 + $0x2c] sm:$0xf]
    %v72 = vld [vmem:[#allocation5 + $0x30] sm:$0xf]
    %v73 = vld [vmem:[#allocation5 + $0x34] sm:$0xf]
    %v74 = vld [vmem:[#allocation5 + $0x38] sm:$0xf]
    %v75 = vld [vmem:[#allocation5 + $0x3c] sm:$0xf]
    %v76 = vld [vmem:[%s2] sm:$0x1]
    %v78 = vlaneseq
    %v79 = vshrl.u32 %v78, 7
    %v80 = vsub.s32 0, %v79
    %v81 = vrot.slane %v76, %v80
    %v99 = vunpack.c.l.b16 %v44
    %v100 = vunpack.c.l.b16 %v45
    %v101 = vunpack.c.l.b16 %v46
    %v102 = vunpack.c.l.b16 %v47
    %v103 = vunpack.c.l.b16 %v48
    %v104 = vunpack.c.l.b16 %v49
    %v105 = vunpack.c.l.b16 %v50
    %v106 = vunpack.c.l.b16 %v51
    %v107 = vunpack.c.l.b16 %v52
    %v108 = vunpack.c.l.b16 %v53
    %v109 = vunpack.c.l.b16 %v54
    %v110 = vunpack.c.l.b16 %v55
    %v111 = vunpack.c.l.b16 %v56
    %v112 = vunpack.c.l.b16 %v57
    %v113 = vunpack.c.l.b16 %v58
    %v114 = vunpack.c.l.b16 %v59
    %v115 = vpack.c.b16 %v100, %v99
    %v116 = vpack.c.b16 %v102, %v101
    %v117 = vpack.c.b16 %v104, %v103
    %v118 = vpack.c.b16 %v106, %v105
    %v119 = vpack.c.b16 %v108, %v107
    %v120 = vpack.c.b16 %v110, %v109
    %v121 = vpack.c.b16 %v112, %v111
    %v122 = vpack.c.b16 %v114, %v113
    %v147 = vunpack.c.l.b16 %v60
    %v148 = vunpack.c.l.b16 %v61
    %v149 = vunpack.c.l.b16 %v62
    %v150 = vunpack.c.l.b16 %v63
    %v151 = vunpack.c.l.b16 %v64
    %v152 = vunpack.c.l.b16 %v65
    %v153 = vunpack.c.l.b16 %v66
    %v154 = vunpack.c.l.b16 %v67
    %v155 = vunpack.c.l.b16 %v68
    %v156 = vunpack.c.l.b16 %v69
    %v157 = vunpack.c.l.b16 %v70
    %v158 = vunpack.c.l.b16 %v71
    %v159 = vunpack.c.l.b16 %v72
    %v160 = vunpack.c.l.b16 %v73
    %v161 = vunpack.c.l.b16 %v74
    %v162 = vunpack.c.l.b16 %v75
    %v163 = vpack.c.b16 %v148, %v147
    %v164 = vpack.c.b16 %v150, %v149
    %v165 = vpack.c.b16 %v152, %v151
    %v166 = vpack.c.b16 %v154, %v153
    %v167 = vpack.c.b16 %v156, %v155
    %v168 = vpack.c.b16 %v158, %v157
    %v169 = vpack.c.b16 %v160, %v159
    %v170 = vpack.c.b16 %v162, %v161
    %179 = vmatprep.subr.bf16.mxu0 0
    %180 = vmatpush1.bf16.msra.mxu0 %v170
    %181 = vmatprep.subr.bf16.mxu0 0
    %182 = vmatpush1.bf16.msra.mxu0 %v169
    %183 = vmatprep.subr.bf16.mxu0 0
    %184 = vmatpush1.bf16.msra.mxu0 %v168
    %185 = vmatprep.subr.bf16.mxu0 0
    %186 = vmatpush1.bf16.msra.mxu0 %v167
    %187 = vmatprep.subr.bf16.mxu0 0
    %188 = vmatpush1.bf16.msra.mxu0 %v166
    %189 = vmatprep.subr.bf16.mxu0 0
    %190 = vmatpush1.bf16.msra.mxu0 %v165
    %191 = vmatprep.subr.bf16.mxu0 0
    %192 = vmatpush1.bf16.msra.mxu0 %v164
    %193 = vmatprep.subr.bf16.mxu0 0
    %194 = vmatpush1.bf16.msra.mxu0 %v163
    %195 = vmatprep.subr.bf16.mxu0 0
    %196 = vmatpush2.bf16.msra.mxu0 0
    %197 = vmatprep.subr.bf16.mxu0 0
    %198 = vmatpush2.bf16.msra.mxu0 0
    %199 = vmatprep.subr.bf16.mxu0 0
    %200 = vmatpush2.bf16.msra.mxu0 0
    %201 = vmatprep.subr.bf16.mxu0 0
    %202 = vmatpush2.bf16.msra.mxu0 0
    %203 = vmatprep.subr.bf16.mxu0 0
    %204 = vmatpush2.bf16.msra.mxu0 0
    %205 = vmatprep.subr.bf16.mxu0 0
    %206 = vmatpush2.bf16.msra.mxu0 0
    %207 = vmatprep.subr.bf16.mxu0 0
    %208 = vmatpush2.bf16.msra.mxu0 0
    %209 = vmatprep.subr.bf16.mxu0 0
    %210 = vmatpush2.bf16.msra.mxu0 0
    %211 = vmatprep.mubr.bf16.mxu0 0
    %212 = vmatmul.mubr.bf16.gmra.mxu0 %v115
    %v213 = vpop.f32.mrf.mxu0
    %v214 = vadd.f32 %v81, %v213
    %v215 = vpop.f32.mrf.mxu0
    %v216 = vpop.f32.mrf.mxu0
    %v217 = vadd.f32 %v81, %v216
    %v218 = vpop.f32.mrf.mxu0
    %219 = vmatprep.mubr.bf16.mxu0 0
    %220 = vmatmul.mubr.bf16.gmra.mxu0 %v116
    %v221 = vpop.f32.mrf.mxu0
    %v222 = vadd.f32 %v81, %v221
    %v223 = vpop.f32.mrf.mxu0
    %v224 = vpop.f32.mrf.mxu0
    %v225 = vadd.f32 %v81, %v224
    %v226 = vpop.f32.mrf.mxu0
    %227 = vmatprep.mubr.bf16.mxu0 0
    %228 = vmatmul.mubr.bf16.gmra.mxu0 %v117
    %v229 = vpop.f32.mrf.mxu0
    %v230 = vadd.f32 %v81, %v229
    %v231 = vpop.f32.mrf.mxu0
    %v232 = vpop.f32.mrf.mxu0
    %v233 = vadd.f32 %v81, %v232
    %v234 = vpop.f32.mrf.mxu0
    %235 = vmatprep.mubr.bf16.mxu0 0
    %236 = vmatmul.mubr.bf16.gmra.mxu0 %v118
    %v237 = vpop.f32.mrf.mxu0
    %v238 = vadd.f32 %v81, %v237
    %v239 = vpop.f32.mrf.mxu0
    %v240 = vpop.f32.mrf.mxu0
    %v241 = vadd.f32 %v81, %v240
    %v242 = vpop.f32.mrf.mxu0
    %243 = vmatprep.mubr.bf16.mxu0 0
    %244 = vmatmul.mubr.bf16.gmra.mxu0 %v119
    %v245 = vpop.f32.mrf.mxu0
    %v246 = vadd.f32 %v81, %v245
    %v247 = vpop.f32.mrf.mxu0
    %v248 = vpop.f32.mrf.mxu0
    %v249 = vadd.f32 %v81, %v248
    %v250 = vpop.f32.mrf.mxu0
    %251 = vmatprep.mubr.bf16.mxu0 0
    %252 = vmatmul.mubr.bf16.gmra.mxu0 %v120
    %v253 = vpop.f32.mrf.mxu0
    %v254 = vadd.f32 %v81, %v253
    %v255 = vpop.f32.mrf.mxu0
    %v256 = vpop.f32.mrf.mxu0
    %v257 = vadd.f32 %v81, %v256
    %v258 = vpop.f32.mrf.mxu0
    %259 = vmatprep.mubr.bf16.mxu0 0
    %260 = vmatmul.mubr.bf16.gmra.mxu0 %v121
    %v261 = vpop.f32.mrf.mxu0
    %v262 = vadd.f32 %v81, %v261
    %v263 = vpop.f32.mrf.mxu0
    %v264 = vpop.f32.mrf.mxu0
    %v265 = vadd.f32 %v81, %v264
    %v266 = vpop.f32.mrf.mxu0
    %267 = vmatprep.mubr.bf16.mxu0 0
    %268 = vmatmul.mubr.bf16.gmra.mxu0 %v122
    %v269 = vpop.f32.mrf.mxu0
    %v270 = vadd.f32 %v81, %v269
    %v271 = vpop.f32.mrf.mxu0
    %v272 = vpop.f32.mrf.mxu0
    %v273 = vadd.f32 %v81, %v272
    %v274 = vpop.f32.mrf.mxu0
    %275 = vdwg.mxu0
    %v276 = vmax.f32 %v214, 0.0
    %v277 = vmax.f32 %v217, 0.0
    %v278 = vmax.f32 %v222, 0.0
    %v279 = vmax.f32 %v225, 0.0
    %v280 = vmax.f32 %v230, 0.0
    %v281 = vmax.f32 %v233, 0.0
    %v282 = vmax.f32 %v238, 0.0
    %v283 = vmax.f32 %v241, 0.0
    %v284 = vmax.f32 %v246, 0.0
    %v285 = vmax.f32 %v249, 0.0
    %v286 = vmax.f32 %v254, 0.0
    %v287 = vmax.f32 %v257, 0.0
    %v288 = vmax.f32 %v262, 0.0
    %v289 = vmax.f32 %v265, 0.0
    %v290 = vmax.f32 %v270, 0.0
    %v291 = vmax.f32 %v273, 0.0
    %v292 = vpack.c.bf16 %v277, %v276
    %v293 = vpack.c.bf16 %v279, %v278
    %v294 = vpack.c.bf16 %v281, %v280
    %v295 = vpack.c.bf16 %v283, %v282
    %v296 = vpack.c.bf16 %v285, %v284
    %v297 = vpack.c.bf16 %v287, %v286
    %v298 = vpack.c.bf16 %v289, %v288
    %v299 = vpack.c.bf16 %v291, %v290
    %300 = vmatprep.subr.bf16.mxu0 0
    %301 = vmatpush1.bf16.msra.mxu0 %v299
    %302 = vmatprep.subr.bf16.mxu0 0
    %303 = vmatpush1.bf16.msra.mxu0 %v298
    %304 = vmatprep.subr.bf16.mxu0 0
    %305 = vmatpush1.bf16.msra.mxu0 %v297
    %306 = vmatprep.subr.bf16.mxu0 0
    %307 = vmatpush1.bf16.msra.mxu0 %v296
    %308 = vmatprep.subr.bf16.mxu0 0
    %309 = vmatpush1.bf16.msra.mxu0 %v295
    %310 = vmatprep.subr.bf16.mxu0 0
    %311 = vmatpush1.bf16.msra.mxu0 %v294
    %312 = vmatprep.subr.bf16.mxu0 0
    %313 = vmatpush1.bf16.msra.mxu0 %v293
    %314 = vmatprep.subr.bf16.mxu0 0
    %315 = vmatpush1.bf16.msra.mxu0 %v292
    %316 = vmatprep.subr.bf16.mxu0 0
    %317 = vmatpush2.bf16.msra.mxu0 0
    %318 = vmatprep.subr.bf16.mxu0 0
    %319 = vmatpush2.bf16.msra.mxu0 0
    %320 = vmatprep.subr.bf16.mxu0 0
    %321 = vmatpush2.bf16.msra.mxu0 0
    %322 = vmatprep.subr.bf16.mxu0 0
    %323 = vmatpush2.bf16.msra.mxu0 0
    %324 = vmatprep.subr.bf16.mxu0 0
    %325 = vmatpush2.bf16.msra.mxu0 0
    %326 = vmatprep.subr.bf16.mxu0 0
    %327 = vmatpush2.bf16.msra.mxu0 0
    %328 = vmatprep.subr.bf16.mxu0 0
    %329 = vmatpush2.bf16.msra.mxu0 0
    %330 = vmatprep.subr.bf16.mxu0 0
    %331 = vmatpush2.bf16.msra.mxu0 0
    %332 = vmatprep.mubr.bf16.mxu0 0
    %333 = vmatmul.mubr.bf16.gmra.mxu0 %v115
    %v334 = vpop.f32.mrf.mxu0
    %v335 = vadd.f32 0.0, %v334
    %v336 = vpop.f32.mrf.mxu0
    %v337 = vpop.f32.mrf.mxu0
    %v338 = vadd.f32 0.0, %v337
    %v339 = vpop.f32.mrf.mxu0
    %340 = vmatprep.mubr.bf16.mxu0 0
    %341 = vmatmul.mubr.bf16.gmra.mxu0 %v116
    %v342 = vpop.f32.mrf.mxu0
    %v343 = vadd.f32 0.0, %v342
    %v344 = vpop.f32.mrf.mxu0
    %v345 = vpop.f32.mrf.mxu0
    %v346 = vadd.f32 0.0, %v345
    %v347 = vpop.f32.mrf.mxu0
    %348 = vmatprep.mubr.bf16.mxu0 0
    %349 = vmatmul.mubr.bf16.gmra.mxu0 %v117
    %v350 = vpop.f32.mrf.mxu0
    %v351 = vadd.f32 0.0, %v350
    %v352 = vpop.f32.mrf.mxu0
    %v353 = vpop.f32.mrf.mxu0
    %v354 = vadd.f32 0.0, %v353
    %v355 = vpop.f32.mrf.mxu0
    %356 = vmatprep.mubr.bf16.mxu0 0
    %357 = vmatmul.mubr.bf16.gmra.mxu0 %v118
    %v358 = vpop.f32.mrf.mxu0
    %v359 = vadd.f32 0.0, %v358
    %v360 = vpop.f32.mrf.mxu0
    %v361 = vpop.f32.mrf.mxu0
    %v362 = vadd.f32 0.0, %v361
    %v363 = vpop.f32.mrf.mxu0
    %364 = vmatprep.mubr.bf16.mxu0 0
    %365 = vmatmul.mubr.bf16.gmra.mxu0 %v119
    %v366 = vpop.f32.mrf.mxu0
    %v367 = vadd.f32 0.0, %v366
    %v368 = vpop.f32.mrf.mxu0
    %v369 = vpop.f32.mrf.mxu0
    %v370 = vadd.f32 0.0, %v369
    %v371 = vpop.f32.mrf.mxu0
    %372 = vmatprep.mubr.bf16.mxu0 0
    %373 = vmatmul.mubr.bf16.gmra.mxu0 %v120
    %v374 = vpop.f32.mrf.mxu0
    %v375 = vadd.f32 0.0, %v374
    %v376 = vpop.f32.mrf.mxu0
    %v377 = vpop.f32.mrf.mxu0
    %v378 = vadd.f32 0.0, %v377
    %v379 = vpop.f32.mrf.mxu0
    %380 = vmatprep.mubr.bf16.mxu0 0
    %381 = vmatmul.mubr.bf16.gmra.mxu0 %v121
    %v382 = vpop.f32.mrf.mxu0
    %v383 = vadd.f32 0.0, %v382
    %v384 = vpop.f32.mrf.mxu0
    %v385 = vpop.f32.mrf.mxu0
    %v386 = vadd.f32 0.0, %v385
    %v387 = vpop.f32.mrf.mxu0
    %388 = vmatprep.mubr.bf16.mxu0 0
    %389 = vmatmul.mubr.bf16.gmra.mxu0 %v122
    %v390 = vpop.f32.mrf.mxu0
    %v391 = vadd.f32 0.0, %v390
    %v392 = vpop.f32.mrf.mxu0
    %v393 = vpop.f32.mrf.mxu0
    %v394 = vadd.f32 0.0, %v393
    %v395 = vpop.f32.mrf.mxu0
    %396 = vdwg.mxu0
    %397 = vst [vmem:[#allocation7] sm:$0xff] %v335
    %398 = vst [vmem:[#allocation7 + $0x8] sm:$0xff] %v338
    %399 = vst [vmem:[#allocation7 + $0x10] sm:$0xff] %v343
    %400 = vst [vmem:[#allocation7 + $0x18] sm:$0xff] %v346
    %401 = vst [vmem:[#allocation7 + $0x20] sm:$0xff] %v351
    %402 = vst [vmem:[#allocation7 + $0x28] sm:$0xff] %v354
    %403 = vst [vmem:[#allocation7 + $0x30] sm:$0xff] %v359
    %404 = vst [vmem:[#allocation7 + $0x38] sm:$0xff] %v362
    %405 = vst [vmem:[#allocation7 + $0x40] sm:$0xff] %v367
    %406 = vst [vmem:[#allocation7 + $0x48] sm:$0xff] %v370
    %407 = vst [vmem:[#allocation7 + $0x50] sm:$0xff] %v375
    %408 = vst [vmem:[#allocation7 + $0x58] sm:$0xff] %v378
    %409 = vst [vmem:[#allocation7 + $0x60] sm:$0xff] %v383
    %410 = vst [vmem:[#allocation7 + $0x68] sm:$0xff] %v386
    %411 = vst [vmem:[#allocation7 + $0x70] sm:$0xff] %v391
    %412 = vst [vmem:[#allocation7 + $0x78] sm:$0xff] %v394
    // Predicated region
    $region22: #{tpu_custom_call.1} parent=1 // pred_check
      _
    $region23: #{tpu_custom_call.1} parent=1 // pred_check_branch
      %414 = sbr.rel (0) target = $region25
    $region24: #{tpu_custom_call.1} parent=1 // pred_region
      %s416 = ssub.s32 2048, 2048
      %417 = vsyncadd [#allocation4], %s416
      %s418 = sshll.u32 [#allocation7], 4
      %s419 = int_to_ptr.vmem [resolvable:$true] %s418
      %424 = dma.vmem_to_hbm [thread:$0]  %s419, 2048, %s3, [#allocation4], 128, 128, 8
    $region25: #{tpu_custom_call.1} parent=1 // pred_fallthru
      _
    // Predicated region
    $region26: #{tpu_custom_call.1} parent=1 // pred_check
      _
    $region27: #{tpu_custom_call.1} parent=1 // pred_check_branch
      %426 = sbr.rel (0) target = $region29
    $region28: #{tpu_custom_call.1} parent=1 // pred_region
      %427 = dma.done [#allocation4], 2048
    $region29: #{tpu_custom_call.1} parent=1 // pred_fallthru
      _
    %428 = vsyncpa [#allocation3], 1
    %429 = vsyncpa [#allocation6], 1
    %430 = vsyncpa [#allocation4], 1

</llo_original>
